<compile_context>
chip_gen: v7x
topology: tpu7x:2x2x1
jax: 0.10.0
libtpu: 0.0.40
codegen_flags: <defaults>
</compile_context>

<pallas_src>
import jax
import jax.numpy as jnp
from jax import lax
from jax.experimental import pallas as pl
from jax.experimental.pallas import tpu as pltpu


# --------------------------------------------------------------------------
# Chip-aware sizing helpers
# --------------------------------------------------------------------------
def _vmem_capacity_bytes():
    try:
        info = pltpu.get_tpu_info()
        cap = getattr(info, "vmem_capacity_bytes", None)
        if cap:
            return int(cap)
    except Exception:
        pass
    return 128 << 20  # v5e / v6e physical VMEM per TensorCore


def _per_batch_row_bytes(g_count, r_rows, lane, kpt, in_itemsize):
    """VMEM bytes needed per batch row of the working set.

    inputs : (G+2) heat streams + 3 offset streams (each 2x a heat stream)
             = (G+8) heat-equivalents, double-buffered by the BlockSpec pipeline.
    temps  : ~6 full-tile f32 temporaries (Mosaic fuses most of the elementwise chain).
    output : rowsums block, double-buffered (the packed scalar block is negligible).
    """
    heat_row = r_rows * lane
    return (2 * (g_count + 8) * heat_row * in_itemsize
            + 6 * heat_row * 4
            + 2 * kpt * lane * 4)


def _pick_batch_tile(batch, per_b, vmem_cap):
    data_budget = int(vmem_cap * 0.60)          # ~77 MiB on 128 MiB chips, ~38 MiB on v7x
    cap = max(1, data_budget // max(1, per_b))
    # v7x: 64 MiB VMEM/TC but 2 TensorCores -> keep >= 2 parallel grid steps.
    if vmem_cap <= (96 << 20) and batch >= 2:
        cap = min(cap, pl.cdiv(batch, 2))
    cap = int(min(cap, batch))
    # Snap down to a divisor of B so the ragged-tail mask is not needed, unless that
    # would waste more than half of the VMEM-derived tile.
    best_div = 1
    for d in range(cap, 0, -1):
        if batch % d == 0:
            best_div = d
            break
    tb = best_div if 2 * best_div >= cap else cap
    return int(max(1, tb))


# --------------------------------------------------------------------------
# Fused reduction kernel
# --------------------------------------------------------------------------
def _make_fused_kernel(g_count, batch, tb, kpt, q_rows, r_rows, y_weight):
    """ref order:
      inputs : g_0..g_{G-1}, target_heat, refine_heat, global_off, refine_off, target_off
      outputs: packed  (1, G+2, LANE)  scalar partial sums (heat_0..heat_{G-1}, goff, roff)
               rowsums (tb, K, LANE)   refine-heat per-(b,k) squared-error lane partials
    """
    need_mask = (batch % tb) != 0

    def kernel(*refs):
        g_refs = refs[:g_count]
        th_ref = refs[g_count]
        rh_ref = refs[g_count + 1]
        goff_ref = refs[g_count + 2]
        roff_ref = refs[g_count + 3]
        toff_ref = refs[g_count + 4]
        packed_ref = refs[g_count + 5]
        rowsums_ref = refs[g_count + 6]

        t = th_ref[...].astype(jnp.float32)                  # (tb, R, LANE)

        if need_mask:
            b0 = pl.program_id(0) * tb
            bid = lax.broadcasted_iota(jnp.int32, (tb, 1, 1), 0) + b0
            valid = bid < batch                              # (tb, 1, 1) bool
        else:
            valid = None

        def lane_partial(x):
            # (tb, R, LANE) -> (1, 1, LANE); the final cross-lane reduce is done in JAX.
            if valid is None:
                s = jnp.sum(x, axis=0, keepdims=True)        # fold batch first (pure VPU adds)
                return jnp.sum(s, axis=1, keepdims=True)     # single sublane reduce
            s = jnp.sum(x, axis=1, keepdims=True)            # (tb, 1, LANE)
            s = jnp.where(valid, s, 0.0)                     # select (NaN-safe), once per call
            return jnp.sum(s, axis=0, keepdims=True)

        rows = []

        # ---- global heat losses, fused:  yw*(l*t - t)^2 + (l - l*t)^2 ----
        for g_ref in g_refs:
            l = g_ref[...].astype(jnp.float32)
            lt = l * t
            dy = lt - t                                      # logit*target - target
            dn = l - lt                                      # logit*(1-target)+target - target
            rows.append(lane_partial(y_weight * (dy * dy) + dn * dn))

        # ---- offset losses (x half = rows [0,R), y half = rows [R,2R)) ----
        txv = toff_ref[:, 0:r_rows, :].astype(jnp.float32)
        tyv = toff_ref[:, r_rows:2 * r_rows, :].astype(jnp.float32)

        def off_sq(off_ref):
            dx = off_ref[:, 0:r_rows, :].astype(jnp.float32) * t - txv
            dyo = off_ref[:, r_rows:2 * r_rows, :].astype(jnp.float32) * t - tyv
            return dx * dx + dyo * dyo

        rows.append(lane_partial(off_sq(goff_ref)))          # global offsets
        rows.append(lane_partial(off_sq(roff_ref)))          # refine offsets

        # One dense (1, G+2, LANE) store instead of 2G+2 tiny output operands.
        packed_ref[...] = jnp.concatenate(rows, axis=1)

        # ---- refine-heat per-(b,k) lane-dense row sums ----
        dr = rh_ref[...].astype(jnp.float32) - t
        d2 = dr * dr                                         # (tb, R, LANE), R = K*Q
        ksums = []
        for k in range(kpt):
            sl = d2[:, k * q_rows:(k + 1) * q_rows, :]       # (tb, Q, LANE) static slice
            ksums.append(jnp.sum(sl, axis=1, keepdims=True)) # (tb, 1, LANE)
        rs = jnp.concatenate(ksums, axis=1)                  # (tb, K, LANE)
        if valid is not None:
            rs = jnp.where(valid, rs, 0.0)
        rowsums_ref[...] = rs

    return kernel


# --------------------------------------------------------------------------
# Pure-JAX reference (mirrors the PyTorch math). Used for testing and as the
# fallback when H*W is not a multiple of 128 (lane-dense layout unavailable).
# --------------------------------------------------------------------------
def cpn_loss_reference(global_outs, global_off_out, refine_heat_out, refine_off_out,
                       target_heat, target_off, *, num_kpt):
    B, K, H, W = target_heat.shape
    mse = lambda a, b: jnp.mean((a - b) ** 2)

    def heat_loss(logit, target):
        y_logit = logit * target
        n_logit = logit * (1 - target) + target
        yw = (H * W - 1) / 2.0
        return mse(y_logit, target) * yw + mse(n_logit, target)

    def off_loss(logit, target, th):
        xl = logit[:, :num_kpt] * th
        yl = logit[:, num_kpt:] * th
        return mse(xl, target[:, :num_kpt]) + mse(yl, target[:, num_kpt:])

    loss = 0.0
    grec = 0.0
    for g in global_outs:
        hl = heat_loss(g, target_heat)
        loss += hl
        grec += hl
    go = off_loss(global_off_out, target_off, target_heat)
    loss += go
    grec += go

    rh = (refine_heat_out - target_heat) ** 2
    ro = off_loss(refine_off_out, target_off, target_heat)
    rl = (rh + ro).mean(axis=3).mean(axis=2)                 # (B, K)
    top_k = num_kpt // 2
    tv, _ = lax.top_k(rl, top_k)
    ohkm = jnp.mean(jnp.sum(tv, axis=1) / top_k)
    loss += ohkm
    return loss, grec, ohkm


# --------------------------------------------------------------------------
# Wrapper reproducing cpnLoss.forward
# --------------------------------------------------------------------------
def cpn_loss(global_outs, global_off_out, refine_heat_out, refine_off_out,
             target_heat, target_off, *, num_kpt, batch_tile=None):
    B, K, H, W = target_heat.shape
    assert K == num_kpt
    HW = H * W
    G = len(global_outs)

    if HW % 128 != 0:
        # TODO(synk): lane-dense Pallas layout requires H*W % 128 == 0; plain-JAX fallback.
        return cpn_loss_reference(global_outs, global_off_out, refine_heat_out,
                                  refine_off_out, target_heat, target_off,
                                  num_kpt=num_kpt)

    LANE = 128
    Q = HW // LANE
    R = K * Q
    N = float(B * K * HW)
    y_weight = (HW - 1) / 2.0

    # Free reshapes only (contiguous row-major): every stream becomes a fully
    # lane/sublane-dense (B, rows, 128) slab; x/y offset halves stay in one operand.
    th3 = target_heat.reshape(B, R, LANE)
    rh3 = refine_heat_out.reshape(B, R, LANE)
    g3 = [g.reshape(B, R, LANE) for g in global_outs]
    go3 = global_off_out.reshape(B, 2 * R, LANE)
    ro3 = refine_off_out.reshape(B, 2 * R, LANE)
    to3 = target_off.reshape(B, 2 * R, LANE)

    vmem_cap = _vmem_capacity_bytes()
    in_itemsize = jnp.dtype(target_heat.dtype).itemsize
    per_b = _per_batch_row_bytes(G, R, LANE, K, in_itemsize)
    if batch_tile is None:
        tb = _pick_batch_tile(B, per_b, vmem_cap)
    else:
        tb = max(1, min(int(batch_tile), B))
    steps = pl.cdiv(B, tb)

    vmem_needed = per_b * tb + 2 * (G + 2) * LANE * 4
    vmem_limit = int(min(max(vmem_needed + (8 << 20), 32 << 20), int(vmem_cap * 0.85)))

    heat_spec = pl.BlockSpec((tb, R, LANE), lambda i: (i, 0, 0))
    off_spec = pl.BlockSpec((tb, 2 * R, LANE), lambda i: (i, 0, 0))
    packed_spec = pl.BlockSpec((1, G + 2, LANE), lambda i: (i, 0, 0))
    rowsum_spec = pl.BlockSpec((tb, K, LANE), lambda i: (i, 0, 0))

    kernel = _make_fused_kernel(G, B, tb, K, Q, R, y_weight)

    packed, rowsums = pl.pallas_call(
        kernel,
        out_shape=(jax.ShapeDtypeStruct((steps, G + 2, LANE), jnp.float32),
                   jax.ShapeDtypeStruct((B, K, LANE), jnp.float32)),
        grid_spec=pltpu.PrefetchScalarGridSpec(
            num_scalar_prefetch=0,
            grid=(steps,),
            in_specs=[heat_spec] * (G + 2) + [off_spec] * 3,
            out_specs=(packed_spec, rowsum_spec)),
        compiler_params=pltpu.CompilerParams(
            dimension_semantics=("parallel",),
            vmem_limit_bytes=vmem_limit),
    )(*g3, th3, rh3, go3, ro3, to3)

    # ---- tiny final reductions + OHKM in plain JAX ----
    heat_sum = jnp.sum(packed[:, :G, :])          # already includes the y-weight
    global_off_sum = jnp.sum(packed[:, G, :])
    refine_off_sum = jnp.sum(packed[:, G + 1, :])

    global_loss = (heat_sum + global_off_sum) / N
    refine_off_loss = refine_off_sum / N

    per_bk = jnp.sum(rowsums, axis=-1) / float(HW) + refine_off_loss   # (B, K)
    top_k = num_kpt // 2
    topvals, _ = lax.top_k(per_bk, top_k)
    ohkm = jnp.mean(jnp.sum(topvals, axis=1) / top_k)

    loss = global_loss + ohkm
    return loss, global_loss, ohkm


# --------------------------------------------------------------------------
# Self-test
# --------------------------------------------------------------------------
def _run_case(B, num_kpt, H, W, G, seed, batch_tile=None):
    key = jax.random.PRNGKey(seed)
    keys = jax.random.split(key, G + 5)
    global_outs = [jax.random.normal(keys[g], (B, num_kpt, H, W), jnp.float32)
                   for g in range(G)]
    global_off_out = jax.random.normal(keys[G + 0], (B, 2 * num_kpt, H, W), jnp.float32)
    refine_heat_out = jax.random.normal(keys[G + 1], (B, num_kpt, H, W), jnp.float32)
    refine_off_out = jax.random.normal(keys[G + 2], (B, 2 * num_kpt, H, W), jnp.float32)
    target_heat = jax.random.uniform(keys[G + 3], (B, num_kpt, H, W), jnp.float32)
    target_off = jax.random.normal(keys[G + 4], (B, 2 * num_kpt, H, W), jnp.float32)

    loss, grec, rrec = cpn_loss(
        global_outs, global_off_out, refine_heat_out, refine_off_out,
        target_heat, target_off, num_kpt=num_kpt, batch_tile=batch_tile)
    loss = jax.block_until_ready(loss)

    rloss, rgrec, rrrec = cpn_loss_reference(
        global_outs, global_off_out, refine_heat_out, refine_off_out,
        target_heat, target_off, num_kpt=num_kpt)

    assert jnp.allclose(loss, rloss, rtol=3e-5, atol=3e-5), (loss, rloss)
    assert jnp.allclose(grec, rgrec, rtol=3e-5, atol=3e-5), (grec, rgrec)
    assert jnp.allclose(rrec, rrrec, rtol=3e-5, atol=3e-5), (rrec, rrrec)


if __name__ == "__main__":
    # main case: B=2, K=4, 16x16 heatmaps, two global outputs (auto tile, no mask path)
    _run_case(B=2, num_kpt=4, H=16, W=16, G=2, seed=0)
    # ragged case: B=3 with a forced batch tile of 2 exercises the cdiv-grid +
    # in-kernel ragged-tail mask path (B % tile != 0).
    _run_case(B=3, num_kpt=4, H=16, W=16, G=2, seed=1, batch_tile=2)
    print("KERNEL_OK")
</pallas_src>

<mosaic_0001>
module attributes {stable_mosaic.version = 11 : i64} {
  func.func @kernel(%arg0: i32, %arg1: memref<2x8x128xf32, #tpu.memory_space<vmem>>, %arg2: memref<2x8x128xf32, #tpu.memory_space<vmem>>, %arg3: memref<2x8x128xf32, #tpu.memory_space<vmem>>, %arg4: memref<2x8x128xf32, #tpu.memory_space<vmem>>, %arg5: memref<2x16x128xf32, #tpu.memory_space<vmem>>, %arg6: memref<2x16x128xf32, #tpu.memory_space<vmem>>, %arg7: memref<2x16x128xf32, #tpu.memory_space<vmem>>, %arg8: memref<1x4x128xf32, #tpu.memory_space<vmem>>, %arg9: memref<2x4x128xf32, #tpu.memory_space<vmem>>) attributes {dimension_semantics = [#tpu.dimension_semantics<parallel>], iteration_bounds = array<i64: 1>, scalar_prefetch = 0 : i64, scratch_operands = 0 : i64, tpu.core_type = #tpu.core_type<tc>, window_params = [{transform_indices = @transform_0, window_bounds = array<i64: 2, 8, 128>}, {transform_indices = @transform_1, window_bounds = array<i64: 2, 8, 128>}, {transform_indices = @transform_2, window_bounds = array<i64: 2, 8, 128>}, {transform_indices = @transform_3, window_bounds = array<i64: 2, 8, 128>}, {transform_indices = @transform_4, window_bounds = array<i64: 2, 16, 128>}, {transform_indices = @transform_5, window_bounds = array<i64: 2, 16, 128>}, {transform_indices = @transform_6, window_bounds = array<i64: 2, 16, 128>}, {transform_indices = @transform_7, window_bounds = array<i64: 1, 4, 128>}, {transform_indices = @transform_8, window_bounds = array<i64: 2, 4, 128>}]} {
    %c0 = arith.constant 0 : index
    %c0_0 = arith.constant 0 : index
    %c0_1 = arith.constant 0 : index
    %0 = vector.load %arg3[%c0, %c0_0, %c0_1] : memref<2x8x128xf32, #tpu.memory_space<vmem>>, vector<2x8x128xf32>
    %c0_2 = arith.constant 0 : index
    %c0_3 = arith.constant 0 : index
    %c0_4 = arith.constant 0 : index
    %1 = vector.load %arg1[%c0_2, %c0_3, %c0_4] : memref<2x8x128xf32, #tpu.memory_space<vmem>>, vector<2x8x128xf32>
    %2 = arith.mulf %1, %0 : vector<2x8x128xf32>
    %3 = arith.subf %2, %0 : vector<2x8x128xf32>
    %4 = arith.subf %1, %2 : vector<2x8x128xf32>
    %5 = arith.mulf %3, %3 : vector<2x8x128xf32>
    %cst = arith.constant 1.275000e+02 : f32
    %6 = vector.broadcast %cst : f32 to vector<2x8x128xf32>
    %7 = arith.mulf %6, %5 : vector<2x8x128xf32>
    %8 = arith.mulf %4, %4 : vector<2x8x128xf32>
    %9 = arith.addf %7, %8 : vector<2x8x128xf32>
    %cst_5 = arith.constant dense<0.000000e+00> : vector<8x128xf32>
    %10 = vector.multi_reduction <add>, %9, %cst_5 [0] : vector<2x8x128xf32> to vector<8x128xf32>
    %11 = vector.shape_cast %10 : vector<8x128xf32> to vector<1x8x128xf32>
    %cst_6 = arith.constant dense<0.000000e+00> : vector<1x128xf32>
    %12 = vector.multi_reduction <add>, %11, %cst_6 [1] : vector<1x8x128xf32> to vector<1x128xf32>
    %13 = vector.shape_cast %12 : vector<1x128xf32> to vector<1x1x128xf32>
    %c0_7 = arith.constant 0 : index
    %c0_8 = arith.constant 0 : index
    %c0_9 = arith.constant 0 : index
    %14 = vector.load %arg2[%c0_7, %c0_8, %c0_9] : memref<2x8x128xf32, #tpu.memory_space<vmem>>, vector<2x8x128xf32>
    %15 = arith.mulf %14, %0 : vector<2x8x128xf32>
    %16 = arith.subf %15, %0 : vector<2x8x128xf32>
    %17 = arith.subf %14, %15 : vector<2x8x128xf32>
    %18 = arith.mulf %16, %16 : vector<2x8x128xf32>
    %cst_10 = arith.constant 1.275000e+02 : f32
    %19 = vector.broadcast %cst_10 : f32 to vector<2x8x128xf32>
    %20 = arith.mulf %19, %18 : vector<2x8x128xf32>
    %21 = arith.mulf %17, %17 : vector<2x8x128xf32>
    %22 = arith.addf %20, %21 : vector<2x8x128xf32>
    %cst_11 = arith.constant dense<0.000000e+00> : vector<8x128xf32>
    %23 = vector.multi_reduction <add>, %22, %cst_11 [0] : vector<2x8x128xf32> to vector<8x128xf32>
    %24 = vector.shape_cast %23 : vector<8x128xf32> to vector<1x8x128xf32>
    %cst_12 = arith.constant dense<0.000000e+00> : vector<1x128xf32>
    %25 = vector.multi_reduction <add>, %24, %cst_12 [1] : vector<1x8x128xf32> to vector<1x128xf32>
    %26 = vector.shape_cast %25 : vector<1x128xf32> to vector<1x1x128xf32>
    %c0_13 = arith.constant 0 : index
    %c0_14 = arith.constant 0 : index
    %c0_15 = arith.constant 0 : index
    %27 = vector.load %arg7[%c0_13, %c0_14, %c0_15] : memref<2x16x128xf32, #tpu.memory_space<vmem>>, vector<2x8x128xf32>
    %c0_16 = arith.constant 0 : index
    %c8 = arith.constant 8 : index
    %c0_17 = arith.constant 0 : index
    %28 = vector.load %arg7[%c0_16, %c8, %c0_17] : memref<2x16x128xf32, #tpu.memory_space<vmem>>, vector<2x8x128xf32>
    %c0_18 = arith.constant 0 : index
    %c0_19 = arith.constant 0 : index
    %c0_20 = arith.constant 0 : index
    %29 = vector.load %arg5[%c0_18, %c0_19, %c0_20] : memref<2x16x128xf32, #tpu.memory_space<vmem>>, vector<2x8x128xf32>
    %30 = arith.mulf %29, %0 : vector<2x8x128xf32>
    %31 = arith.subf %30, %27 : vector<2x8x128xf32>
    %c0_21 = arith.constant 0 : index
    %c8_22 = arith.constant 8 : index
    %c0_23 = arith.constant 0 : index
    %32 = vector.load %arg5[%c0_21, %c8_22, %c0_23] : memref<2x16x128xf32, #tpu.memory_space<vmem>>, vector<2x8x128xf32>
    %33 = arith.mulf %32, %0 : vector<2x8x128xf32>
    %34 = arith.subf %33, %28 : vector<2x8x128xf32>
    %35 = arith.mulf %31, %31 : vector<2x8x128xf32>
    %36 = arith.mulf %34, %34 : vector<2x8x128xf32>
    %37 = arith.addf %35, %36 : vector<2x8x128xf32>
    %cst_24 = arith.constant dense<0.000000e+00> : vector<8x128xf32>
    %38 = vector.multi_reduction <add>, %37, %cst_24 [0] : vector<2x8x128xf32> to vector<8x128xf32>
    %39 = vector.shape_cast %38 : vector<8x128xf32> to vector<1x8x128xf32>
    %cst_25 = arith.constant dense<0.000000e+00> : vector<1x128xf32>
    %40 = vector.multi_reduction <add>, %39, %cst_25 [1] : vector<1x8x128xf32> to vector<1x128xf32>
    %41 = vector.shape_cast %40 : vector<1x128xf32> to vector<1x1x128xf32>
    %c0_26 = arith.constant 0 : index
    %c0_27 = arith.constant 0 : index
    %c0_28 = arith.constant 0 : index
    %42 = vector.load %arg6[%c0_26, %c0_27, %c0_28] : memref<2x16x128xf32, #tpu.memory_space<vmem>>, vector<2x8x128xf32>
    %43 = arith.mulf %42, %0 : vector<2x8x128xf32>
    %44 = arith.subf %43, %27 : vector<2x8x128xf32>
    %c0_29 = arith.constant 0 : index
    %c8_30 = arith.constant 8 : index
    %c0_31 = arith.constant 0 : index
    %45 = vector.load %arg6[%c0_29, %c8_30, %c0_31] : memref<2x16x128xf32, #tpu.memory_space<vmem>>, vector<2x8x128xf32>
    %46 = arith.mulf %45, %0 : vector<2x8x128xf32>
    %47 = arith.subf %46, %28 : vector<2x8x128xf32>
    %48 = arith.mulf %44, %44 : vector<2x8x128xf32>
    %49 = arith.mulf %47, %47 : vector<2x8x128xf32>
    %50 = arith.addf %48, %49 : vector<2x8x128xf32>
    %cst_32 = arith.constant dense<0.000000e+00> : vector<8x128xf32>
    %51 = vector.multi_reduction <add>, %50, %cst_32 [0] : vector<2x8x128xf32> to vector<8x128xf32>
    %52 = vector.shape_cast %51 : vector<8x128xf32> to vector<1x8x128xf32>
    %cst_33 = arith.constant dense<0.000000e+00> : vector<1x128xf32>
    %53 = vector.multi_reduction <add>, %52, %cst_33 [1] : vector<1x8x128xf32> to vector<1x128xf32>
    %54 = vector.shape_cast %53 : vector<1x128xf32> to vector<1x1x128xf32>
    %55 = tpu.concatenate %13, %26, %41, %54 in 1 : vector<1x1x128xf32>, vector<1x1x128xf32>, vector<1x1x128xf32>, vector<1x1x128xf32> -> vector<1x4x128xf32>
    %c0_34 = arith.constant 0 : index
    %c0_35 = arith.constant 0 : index
    %c0_36 = arith.constant 0 : index
    %56 = vector.load %arg8[%c0_34, %c0_35, %c0_36] : memref<1x4x128xf32, #tpu.memory_space<vmem>>, vector<1x4x128xf32>
    tpu.vector_store %arg8[%c0_34, %c0_35, %c0_36], %55 {strides = array<i32>} : memref<1x4x128xf32, #tpu.memory_space<vmem>>, vector<1x4x128xf32>,
    %c0_37 = arith.constant 0 : index
    %c0_38 = arith.constant 0 : index
    %c0_39 = arith.constant 0 : index
    %57 = vector.load %arg4[%c0_37, %c0_38, %c0_39] : memref<2x8x128xf32, #tpu.memory_space<vmem>>, vector<2x8x128xf32>
    %58 = arith.subf %57, %0 : vector<2x8x128xf32>
    %59 = arith.mulf %58, %58 : vector<2x8x128xf32>
    %60 = vector.extract_strided_slice %59 {offsets = [0, 0, 0], sizes = [2, 2, 128], strides = [1, 1, 1]} : vector<2x8x128xf32> to vector<2x2x128xf32>
    %cst_40 = arith.constant dense<0.000000e+00> : vector<2x128xf32>
    %61 = vector.multi_reduction <add>, %60, %cst_40 [1] : vector<2x2x128xf32> to vector<2x128xf32>
    %62 = vector.shape_cast %61 : vector<2x128xf32> to vector<2x1x128xf32>
    %63 = vector.extract_strided_slice %59 {offsets = [0, 2, 0], sizes = [2, 2, 128], strides = [1, 1, 1]} : vector<2x8x128xf32> to vector<2x2x128xf32>
    %cst_41 = arith.constant dense<0.000000e+00> : vector<2x128xf32>
    %64 = vector.multi_reduction <add>, %63, %cst_41 [1] : vector<2x2x128xf32> to vector<2x128xf32>
    %65 = vector.shape_cast %64 : vector<2x128xf32> to vector<2x1x128xf32>
    %66 = vector.extract_strided_slice %59 {offsets = [0, 4, 0], sizes = [2, 2, 128], strides = [1, 1, 1]} : vector<2x8x128xf32> to vector<2x2x128xf32>
    %cst_42 = arith.constant dense<0.000000e+00> : vector<2x128xf32>
    %67 = vector.multi_reduction <add>, %66, %cst_42 [1] : vector<2x2x128xf32> to vector<2x128xf32>
    %68 = vector.shape_cast %67 : vector<2x128xf32> to vector<2x1x128xf32>
    %69 = vector.extract_strided_slice %59 {offsets = [0, 6, 0], sizes = [2, 2, 128], strides = [1, 1, 1]} : vector<2x8x128xf32> to vector<2x2x128xf32>
    %cst_43 = arith.constant dense<0.000000e+00> : vector<2x128xf32>
    %70 = vector.multi_reduction <add>, %69, %cst_43 [1] : vector<2x2x128xf32> to vector<2x128xf32>
    %71 = vector.shape_cast %70 : vector<2x128xf32> to vector<2x1x128xf32>
    %72 = tpu.concatenate %62, %65, %68, %71 in 1 : vector<2x1x128xf32>, vector<2x1x128xf32>, vector<2x1x128xf32>, vector<2x1x128xf32> -> vector<2x4x128xf32>
    %c0_44 = arith.constant 0 : index
    %c0_45 = arith.constant 0 : index
    %c0_46 = arith.constant 0 : index
    %73 = vector.load %arg9[%c0_44, %c0_45, %c0_46] : memref<2x4x128xf32, #tpu.memory_space<vmem>>, vector<2x4x128xf32>
    tpu.vector_store %arg9[%c0_44, %c0_45, %c0_46], %72 {strides = array<i32>} : memref<2x4x128xf32, #tpu.memory_space<vmem>>, vector<2x4x128xf32>,
    return
  }
  func.func @transform_0(%arg0: i32) -> (i32, i32, i32) {
    %c0_i32 = arith.constant 0 : i32
    %c0_i32_0 = arith.constant 0 : i32
    %c0_i32_1 = arith.constant 0 : i32
    return %arg0, %c0_i32, %c0_i32_0 : i32, i32, i32
  }
  func.func @transform_1(%arg0: i32) -> (i32, i32, i32) {
    %c0_i32 = arith.constant 0 : i32
    %c0_i32_0 = arith.constant 0 : i32
    %c0_i32_1 = arith.constant 0 : i32
    return %arg0, %c0_i32, %c0_i32_0 : i32, i32, i32
  }
  func.func @transform_2(%arg0: i32) -> (i32, i32, i32) {
    %c0_i32 = arith.constant 0 : i32
    %c0_i32_0 = arith.constant 0 : i32
    %c0_i32_1 = arith.constant 0 : i32
    return %arg0, %c0_i32, %c0_i32_0 : i32, i32, i32
  }
  func.func @transform_3(%arg0: i32) -> (i32, i32, i32) {
    %c0_i32 = arith.constant 0 : i32
    %c0_i32_0 = arith.constant 0 : i32
    %c0_i32_1 = arith.constant 0 : i32
    return %arg0, %c0_i32, %c0_i32_0 : i32, i32, i32
  }
  func.func @transform_4(%arg0: i32) -> (i32, i32, i32) {
    %c0_i32 = arith.constant 0 : i32
    %c0_i32_0 = arith.constant 0 : i32
    %c0_i32_1 = arith.constant 0 : i32
    return %arg0, %c0_i32, %c0_i32_0 : i32, i32, i32
  }
  func.func @transform_5(%arg0: i32) -> (i32, i32, i32) {
    %c0_i32 = arith.constant 0 : i32
    %c0_i32_0 = arith.constant 0 : i32
    %c0_i32_1 = arith.constant 0 : i32
    return %arg0, %c0_i32, %c0_i32_0 : i32, i32, i32
  }
  func.func @transform_6(%arg0: i32) -> (i32, i32, i32) {
    %c0_i32 = arith.constant 0 : i32
    %c0_i32_0 = arith.constant 0 : i32
    %c0_i32_1 = arith.constant 0 : i32
    return %arg0, %c0_i32, %c0_i32_0 : i32, i32, i32
  }
  func.func @transform_7(%arg0: i32) -> (i32, i32, i32) {
    %c0_i32 = arith.constant 0 : i32
    %c0_i32_0 = arith.constant 0 : i32
    %c0_i32_1 = arith.constant 0 : i32
    return %arg0, %c0_i32, %c0_i32_0 : i32, i32, i32
  }
  func.func @transform_8(%arg0: i32) -> (i32, i32, i32) {
    %c0_i32 = arith.constant 0 : i32
    %c0_i32_0 = arith.constant 0 : i32
    %c0_i32_1 = arith.constant 0 : i32
    return %arg0, %c0_i32, %c0_i32_0 : i32, i32, i32
  }
}

</mosaic_0001>

<llo_original>
// kernel: tpu_custom_call.1
$region0: #{tpu_custom_call.1}
  #allocation0 [shape = 'u32[]', space=smem, size = 0x4, offset = 0x4, fixed_abs, tag = 'smem constant byte address 0x4 - core index']
  #allocation1 [shape = 'u32[144,128]{1,0:T(1,128)}', space=vmem, size = 0x12000, scoped, tag = 'internal scratch']
  %s0 = inlined_call_operand.hbm [shape: f32[2,8,128], index: 0, kind: input, shape index: {}]
  %s1 = inlined_call_operand.hbm [shape: f32[2,8,128], index: 1, kind: input, shape index: {}]
  %s2 = inlined_call_operand.hbm [shape: f32[2,8,128], index: 2, kind: input, shape index: {}]
  %s3 = inlined_call_operand.hbm [shape: f32[2,8,128], index: 3, kind: input, shape index: {}]
  %s4 = inlined_call_operand.hbm [shape: f32[2,16,128], index: 4, kind: input, shape index: {}]
  %s5 = inlined_call_operand.hbm [shape: f32[2,16,128], index: 5, kind: input, shape index: {}]
  %s6 = inlined_call_operand.hbm [shape: f32[2,16,128], index: 6, kind: input, shape index: {}]
  %s7 = inlined_call_operand.hbm [shape: f32[1,4,128], index: 7, kind: output, shape index: {0}]
  %s8 = inlined_call_operand.hbm [shape: f32[2,4,128], index: 8, kind: output, shape index: {1}]
  %9 = xla_tuple %s7, %s8
  %s10 = sld [smem:[#allocation0]]
  $region74: #{tpu_custom_call.1} parent=0
    _
  %s12 = ssub.s32 1, %s10
  %s13 = scalar_select 0, %s12, %s10
  $region1: #{tpu_custom_call.1} parent=0
    #allocation2 [shape = 'u8[8192]{0}', space=vmem, size = 0x2000, scoped, tag = 'input window, operand 0, single buffered']
    #allocation3 [shape = 's32[1]{0}', space=sflag, size = 0x4, scoped, tag = 'scoped memory for tpu_custom_call.1']
    #allocation4 [shape = 's32[1]{0}', space=sflag, size = 0x4, scoped, tag = 'scoped memory for tpu_custom_call.1']
    #allocation5 [shape = 'u8[8192]{0}', space=vmem, size = 0x2000, scoped, tag = 'input window, operand 1, single buffered']
    #allocation6 [shape = 's32[1]{0}', space=sflag, size = 0x4, scoped, tag = 'scoped memory for tpu_custom_call.1']
    #allocation7 [shape = 'u8[8192]{0}', space=vmem, size = 0x2000, scoped, tag = 'input window, operand 2, single buffered']
    #allocation8 [shape = 'u8[8192]{0}', space=vmem, size = 0x2000, scoped, tag = 'input window, operand 3, single buffered']
    #allocation9 [shape = 's32[1]{0}', space=sflag, size = 0x4, scoped, tag = 'scoped memory for tpu_custom_call.1']
    #allocation10 [shape = 'u8[16384]{0}', space=vmem, size = 0x4000, scoped, tag = 'input window, operand 4, single buffered']
    #allocation11 [shape = 'u8[16384]{0}', space=vmem, size = 0x4000, scoped, tag = 'input window, operand 5, single buffered']
    #allocation12 [shape = 's32[1]{0}', space=sflag, size = 0x4, scoped, tag = 'scoped memory for tpu_custom_call.1']
    #allocation13 [shape = 'u8[16384]{0}', space=vmem, size = 0x4000, scoped, tag = 'input window, operand 6, single buffered']
    #allocation14 [shape = 'u8[2048]{0}', space=vmem, size = 0x800, scoped, tag = 'output window, operand 0, single buffered']
    #allocation15 [shape = 'u8[4096]{0}', space=vmem, size = 0x1000, scoped, tag = 'output window, operand 1, single buffered']
    #allocation16 [shape = 's32[1]{0}', space=sflag, size = 0x4, scoped, tag = 'scoped memory for tpu_custom_call.1']
    %14 = vsyncpa [#allocation3], 0
    %15 = vsyncpa [#allocation6], 0
    %16 = vsyncpa [#allocation9], 0
    %17 = vsyncpa [#allocation12], 0
    %18 = vsyncpa [#allocation4], 0
    %19 = vsyncpa [#allocation16], 0
    // Predicated region
    $region2: #{tpu_custom_call.1} parent=1 // pred_check
      _
    $region3: #{tpu_custom_call.1} parent=1 // pred_check_branch
      %21 = sbr.rel (0) target = $region5
    $region4: #{tpu_custom_call.1} parent=1 // pred_region
      %s23 = ssub.s32 256, 256
      %24 = vsyncadd [#allocation3], %s23
      %s25 = sshll.u32 [#allocation2], 4
      %s26 = int_to_ptr.vmem [resolvable:$true] %s25
      %31 = dma.hbm_to_vmem [thread:$0]  %s0, 256, %s26, [#allocation3], 128, 128, 8
    $region5: #{tpu_custom_call.1} parent=1 // pred_fallthru
      _
    // Predicated region
    $region6: #{tpu_custom_call.1} parent=1 // pred_check
      _
    $region7: #{tpu_custom_call.1} parent=1 // pred_check_branch
      %33 = sbr.rel (0) target = $region9
    $region8: #{tpu_custom_call.1} parent=1 // pred_region
      %s35 = ssub.s32 256, 256
      %36 = vsyncadd [#allocation6], %s35
      %s37 = sshll.u32 [#allocation5], 4
      %s38 = int_to_ptr.vmem [resolvable:$true] %s37
      %43 = dma.hbm_to_vmem [thread:$0]  %s1, 256, %s38, [#allocation6], 128, 128, 8
    $region9: #{tpu_custom_call.1} parent=1 // pred_fallthru
      _
    // Predicated region
    $region10: #{tpu_custom_call.1} parent=1 // pred_check
      _
    $region11: #{tpu_custom_call.1} parent=1 // pred_check_branch
      %45 = sbr.rel (0) target = $region13
    $region12: #{tpu_custom_call.1} parent=1 // pred_region
      %s47 = ssub.s32 256, 256
      %48 = vsyncadd [#allocation6], %s47
      %s49 = sshll.u32 [#allocation7], 4
      %s50 = int_to_ptr.vmem [resolvable:$true] %s49
      %55 = dma.hbm_to_vmem [thread:$0]  %s2, 256, %s50, [#allocation6], 128, 128, 8
    $region13: #{tpu_custom_call.1} parent=1 // pred_fallthru
      _
    // Predicated region
    $region14: #{tpu_custom_call.1} parent=1 // pred_check
      _
    $region15: #{tpu_custom_call.1} parent=1 // pred_check_branch
      %57 = sbr.rel (0) target = $region17
    $region16: #{tpu_custom_call.1} parent=1 // pred_region
      %s59 = ssub.s32 256, 256
      %60 = vsyncadd [#allocation9], %s59
      %s61 = sshll.u32 [#allocation8], 4
      %s62 = int_to_ptr.vmem [resolvable:$true] %s61
      %67 = dma.hbm_to_vmem [thread:$0]  %s3, 256, %s62, [#allocation9], 128, 128, 8
    $region17: #{tpu_custom_call.1} parent=1 // pred_fallthru
      _
    // Predicated region
    $region18: #{tpu_custom_call.1} parent=1 // pred_check
      _
    $region19: #{tpu_custom_call.1} parent=1 // pred_check_branch
      %69 = sbr.rel (0) target = $region21
    $region20: #{tpu_custom_call.1} parent=1 // pred_region
      %s71 = ssub.s32 512, 512
      %72 = vsyncadd [#allocation9], %s71
      %s73 = sshll.u32 [#allocation10], 4
      %s74 = int_to_ptr.vmem [resolvable:$true] %s73
      %79 = dma.hbm_to_vmem [thread:$0]  %s4, 512, %s74, [#allocation9], 128, 128, 8
    $region21: #{tpu_custom_call.1} parent=1 // pred_fallthru
      _
    // Predicated region
    $region22: #{tpu_custom_call.1} parent=1 // pred_check
      _
    $region23: #{tpu_custom_call.1} parent=1 // pred_check_branch
      %81 = sbr.rel (0) target = $region25
    $region24: #{tpu_custom_call.1} parent=1 // pred_region
      %s83 = ssub.s32 512, 512
      %84 = vsyncadd [#allocation12], %s83
      %s85 = sshll.u32 [#allocation11], 4
      %s86 = int_to_ptr.vmem [resolvable:$true] %s85
      %91 = dma.hbm_to_vmem [thread:$0]  %s5, 512, %s86, [#allocation12], 128, 128, 8
    $region25: #{tpu_custom_call.1} parent=1 // pred_fallthru
      _
    // Predicated region
    $region26: #{tpu_custom_call.1} parent=1 // pred_check
      _
    $region27: #{tpu_custom_call.1} parent=1 // pred_check_branch
      %93 = sbr.rel (0) target = $region29
    $region28: #{tpu_custom_call.1} parent=1 // pred_region
      %s95 = ssub.s32 512, 512
      %96 = vsyncadd [#allocation12], %s95
      %s97 = sshll.u32 [#allocation13], 4
      %s98 = int_to_ptr.vmem [resolvable:$true] %s97
      %103 = dma.hbm_to_vmem [thread:$0]  %s6, 512, %s98, [#allocation12], 128, 128, 8
    $region29: #{tpu_custom_call.1} parent=1 // pred_fallthru
      _
    // Predicated region
    $region30: #{tpu_custom_call.1} parent=1 // pred_check
      _
    $region31: #{tpu_custom_call.1} parent=1 // pred_check_branch
      %105 = sbr.rel (0) target = $region33
    $region32: #{tpu_custom_call.1} parent=1 // pred_region
      %106 = dma.done [#allocation3], 256
    $region33: #{tpu_custom_call.1} parent=1 // pred_fallthru
      _
    // Predicated region
    $region34: #{tpu_custom_call.1} parent=1 // pred_check
      _
    $region35: #{tpu_custom_call.1} parent=1 // pred_check_branch
      %108 = sbr.rel (0) target = $region37
    $region36: #{tpu_custom_call.1} parent=1 // pred_region
      %109 = dma.done [#allocation6], 256
    $region37: #{tpu_custom_call.1} parent=1 // pred_fallthru
      _
    // Predicated region
    $region38: #{tpu_custom_call.1} parent=1 // pred_check
      _
    $region39: #{tpu_custom_call.1} parent=1 // pred_check_branch
      %111 = sbr.rel (0) target = $region41
    $region40: #{tpu_custom_call.1} parent=1 // pred_region
      %112 = dma.done [#allocation6], 256
    $region41: #{tpu_custom_call.1} parent=1 // pred_fallthru
      _
    // Predicated region
    $region42: #{tpu_custom_call.1} parent=1 // pred_check
      _
    $region43: #{tpu_custom_call.1} parent=1 // pred_check_branch
      %114 = sbr.rel (0) target = $region45
    $region44: #{tpu_custom_call.1} parent=1 // pred_region
      %115 = dma.done [#allocation9], 256
    $region45: #{tpu_custom_call.1} parent=1 // pred_fallthru
      _
    // Predicated region
    $region46: #{tpu_custom_call.1} parent=1 // pred_check
      _
    $region47: #{tpu_custom_call.1} parent=1 // pred_check_branch
      %117 = sbr.rel (0) target = $region49
    $region48: #{tpu_custom_call.1} parent=1 // pred_region
      %118 = dma.done [#allocation9], 512
    $region49: #{tpu_custom_call.1} parent=1 // pred_fallthru
      _
    // Predicated region
    $region50: #{tpu_custom_call.1} parent=1 // pred_check
      _
    $region51: #{tpu_custom_call.1} parent=1 // pred_check_branch
      %120 = sbr.rel (0) target = $region53
    $region52: #{tpu_custom_call.1} parent=1 // pred_region
      %121 = dma.done [#allocation12], 512
    $region53: #{tpu_custom_call.1} parent=1 // pred_fallthru
      _
    // Predicated region
    $region54: #{tpu_custom_call.1} parent=1 // pred_check
      _
    $region55: #{tpu_custom_call.1} parent=1 // pred_check_branch
      %123 = sbr.rel (0) target = $region57
    $region56: #{tpu_custom_call.1} parent=1 // pred_region
      %124 = dma.done [#allocation12], 512
    $region57: #{tpu_custom_call.1} parent=1 // pred_fallthru
      _
    %v125 = vld [vmem:[#allocation7] sm:$0xff]
    %v126 = vld [vmem:[#allocation7 + $0x8] sm:$0xff]
    %v127 = vld [vmem:[#allocation2] sm:$0xff]
    %v128 = vld [vmem:[#allocation2 + $0x8] sm:$0xff]
    %v129 = vmul.f32 %v127, %v125
    %v130 = vmul.f32 %v128, %v126
    %v131 = vsub.f32 %v129, %v125
    %v132 = vsub.f32 %v130, %v126
    %v133 = vsub.f32 %v127, %v129
    %v134 = vsub.f32 %v128, %v130
    %v135 = vmul.f32 %v131, %v131
    %v136 = vmul.f32 %v132, %v132
    %v137 = vmul.f32 %v135, 127.5
    %v138 = vmul.f32 %v136, 127.5
    %v139 = vmul.f32 %v133, %v133
    %v140 = vmul.f32 %v134, %v134
    %v141 = vadd.f32 %v137, %v139
    %v142 = vadd.f32 %v138, %v140
    %v143 = vadd.f32 %v141, %v142
    %v144 = vrot.slane %v143, 4
    %v145 = vadd.f32 %v143, %v144
    %v146 = vrot.slane %v145, 2
    %v147 = vadd.f32 %v145, %v146
    %v148 = vrot.slane %v147, 1
    %v149 = vadd.f32 %v147, %v148
    %v150 = vld [vmem:[#allocation5] sm:$0xff]
    %v151 = vld [vmem:[#allocation5 + $0x8] sm:$0xff]
    %v152 = vmul.f32 %v150, %v125
    %v153 = vmul.f32 %v151, %v126
    %v154 = vsub.f32 %v152, %v125
    %v155 = vsub.f32 %v153, %v126
    %v156 = vsub.f32 %v150, %v152
    %v157 = vsub.f32 %v151, %v153
    %v158 = vmul.f32 %v154, %v154
    %v159 = vmul.f32 %v155, %v155
    %v160 = vmul.f32 %v158, 127.5
    %v161 = vmul.f32 %v159, 127.5
    %v162 = vmul.f32 %v156, %v156
    %v163 = vmul.f32 %v157, %v157
    %v164 = vadd.f32 %v160, %v162
    %v165 = vadd.f32 %v161, %v163
    %v166 = vadd.f32 %v164, %v165
    %v167 = vrot.slane %v166, 4
    %v168 = vadd.f32 %v166, %v167
    %v169 = vrot.slane %v168, 2
    %v170 = vadd.f32 %v168, %v169
    %v171 = vrot.slane %v170, 1
    %v172 = vadd.f32 %v170, %v171
    %v173 = vld [vmem:[#allocation13] sm:$0xff]
    %v174 = vld [vmem:[#allocation13 + $0x10] sm:$0xff]
    %v175 = vld [vmem:[#allocation13 + $0x8] sm:$0xff]
    %v176 = vld [vmem:[#allocation13 + $0x18] sm:$0xff]
    %v177 = vld [vmem:[#allocation10] sm:$0xff]
    %v178 = vld [vmem:[#allocation10 + $0x10] sm:$0xff]
    %v179 = vmul.f32 %v177, %v125
    %v180 = vmul.f32 %v178, %v126
    %v181 = vsub.f32 %v179, %v173
    %v182 = vsub.f32 %v180, %v174
    %v183 = vld [vmem:[#allocation10 + $0x8] sm:$0xff]
    %v184 = vld [vmem:[#allocation10 + $0x18] sm:$0xff]
    %v185 = vmul.f32 %v183, %v125
    %v186 = vmul.f32 %v184, %v126
    %v187 = vsub.f32 %v185, %v175
    %v188 = vsub.f32 %v186, %v176
    %v189 = vmul.f32 %v181, %v181
    %v190 = vmul.f32 %v182, %v182
    %v191 = vmul.f32 %v187, %v187
    %v192 = vmul.f32 %v188, %v188
    %v193 = vadd.f32 %v189, %v191
    %v194 = vadd.f32 %v190, %v192
    %v195 = vadd.f32 %v193, %v194
    %v196 = vrot.slane %v195, 4
    %v197 = vadd.f32 %v195, %v196
    %v198 = vrot.slane %v197, 2
    %v199 = vadd.f32 %v197, %v198
    %v200 = vrot.slane %v199, 1
    %v201 = vadd.f32 %v199, %v200
    %v202 = vld [vmem:[#allocation11] sm:$0xff]
    %v203 = vld [vmem:[#allocation11 + $0x10] sm:$0xff]
    %v204 = vmul.f32 %v202, %v125
    %v205 = vmul.f32 %v203, %v126
    %v206 = vsub.f32 %v204, %v173
    %v207 = vsub.f32 %v205, %v174
    %v208 = vld [vmem:[#allocation11 + $0x8] sm:$0xff]
    %v209 = vld [vmem:[#allocation11 + $0x18] sm:$0xff]
    %v210 = vmul.f32 %v208, %v125
    %v211 = vmul.f32 %v209, %v126
    %v212 = vsub.f32 %v210, %v175
    %v213 = vsub.f32 %v211, %v176
    %v214 = vmul.f32 %v206, %v206
    %v215 = vmul.f32 %v207, %v207
    %v216 = vmul.f32 %v212, %v212
    %v217 = vmul.f32 %v213, %v213
    %v218 = vadd.f32 %v214, %v216
    %v219 = vadd.f32 %v215, %v217
    %v220 = vadd.f32 %v218, %v219
    %v221 = vrot.slane %v220, 4
    %v222 = vadd.f32 %v220, %v221
    %v223 = vrot.slane %v222, 2
    %v224 = vadd.f32 %v222, %v223
    %v225 = vrot.slane %v224, 1
    %v226 = vadd.f32 %v224, %v225
    %vm227 = vcmask 1040384
    %v228 = vsel %vm227, %v149, %v172
    %vm229 = vcmask 1041408
    %v230 = vsel %vm229, %v228, %v201
    %vm231 = vcmask 1042432
    %v232 = vsel %vm231, %v230, %v226
    %233 = vst [vmem:[#allocation14] sm:$0xf] %v232
    %v234 = vld [vmem:[#allocation8] sm:$0xff]
    %v235 = vld [vmem:[#allocation8 + $0x8] sm:$0xff]
    %v236 = vsub.f32 %v234, %v125
    %v237 = vsub.f32 %v235, %v126
    %v238 = vmul.f32 %v236, %v236
    %v239 = vmul.f32 %v237, %v237
    %v240 = vsel %vm229, %v238, 0.0
    %v241 = vrot.slane %v240, 4
    %v242 = vadd.f32 %v240, %v241
    %v243 = vrot.slane %v242, 2
    %v244 = vadd.f32 %v242, %v243
    %v245 = vrot.slane %v244, 1
    %v246 = vadd.f32 %v244, %v245
    %v247 = vsel %vm229, %v239, 0.0
    %v248 = vrot.slane %v247, 4
    %v249 = vadd.f32 %v247, %v248
    %v250 = vrot.slane %v249, 2
    %v251 = vadd.f32 %v249, %v250
    %v252 = vrot.slane %v251, 1
    %v253 = vadd.f32 %v251, %v252
    %v256 = vrot.slane %v238, 2
    %v257 = vrot.slane %v239, 2
    %v260 = vsel %vm229, %v256, 0.0
    %v261 = vrot.slane %v260, 4
    %v262 = vadd.f32 %v260, %v261
    %v263 = vrot.slane %v262, 2
    %v264 = vadd.f32 %v262, %v263
    %v265 = vrot.slane %v264, 1
    %v266 = vadd.f32 %v264, %v265
    %v267 = vsel %vm229, %v257, 0.0
    %v268 = vrot.slane %v267, 4
    %v269 = vadd.f32 %v267, %v268
    %v270 = vrot.slane %v269, 2
    %v271 = vadd.f32 %v269, %v270
    %v272 = vrot.slane %v271, 1
    %v273 = vadd.f32 %v271, %v272
    %v274 = vrot.slane %v238, 4
    %v275 = vrot.slane %v239, 4
    %v278 = vsel %vm229, %v274, 0.0
    %v279 = vrot.slane %v278, 4
    %v280 = vadd.f32 %v278, %v279
    %v281 = vrot.slane %v280, 2
    %v282 = vadd.f32 %v280, %v281
    %v283 = vrot.slane %v282, 1
    %v284 = vadd.f32 %v282, %v283
    %v285 = vsel %vm229, %v275, 0.0
    %v286 = vrot.slane %v285, 4
    %v287 = vadd.f32 %v285, %v286
    %v288 = vrot.slane %v287, 2
    %v289 = vadd.f32 %v287, %v288
    %v290 = vrot.slane %v289, 1
    %v291 = vadd.f32 %v289, %v290
    %v292 = vrot.slane %v238, 6
    %v293 = vrot.slane %v239, 6
    %v296 = vsel %vm229, %v292, 0.0
    %v297 = vrot.slane %v296, 4
    %v298 = vadd.f32 %v296, %v297
    %v299 = vrot.slane %v298, 2
    %v300 = vadd.f32 %v298, %v299
    %v301 = vrot.slane %v300, 1
    %v302 = vadd.f32 %v300, %v301
    %v303 = vsel %vm229, %v293, 0.0
    %v304 = vrot.slane %v303, 4
    %v305 = vadd.f32 %v303, %v304
    %v306 = vrot.slane %v305, 2
    %v307 = vadd.f32 %v305, %v306
    %v308 = vrot.slane %v307, 1
    %v309 = vadd.f32 %v307, %v308
    %v310 = vsel %vm227, %v246, %v266
    %v311 = vsel %vm227, %v253, %v273
    %v312 = vsel %vm229, %v310, %v284
    %v313 = vsel %vm229, %v311, %v291
    %v314 = vsel %vm231, %v312, %v302
    %v315 = vsel %vm231, %v313, %v309
    %316 = vst [vmem:[#allocation15] sm:$0xf] %v314
    %317 = vst [vmem:[#allocation15 + $0x4] sm:$0xf] %v315
    // Predicated region
    $region58: #{tpu_custom_call.1} parent=1 // pred_check
      _
    $region59: #{tpu_custom_call.1} parent=1 // pred_check_branch
      %319 = sbr.rel (0) target = $region61
    $region60: #{tpu_custom_call.1} parent=1 // pred_region
      %s321 = ssub.s32 64, 64
      %322 = vsyncadd [#allocation4], %s321
      %s324 = sshll.u32 [#allocation14], 4
      %s325 = int_to_ptr.vmem [resolvable:$true] %s324
      %327 = dma.vmem_to_hbm [thread:$0]  %s325, 64, %s7, [#allocation4]
    $region61: #{tpu_custom_call.1} parent=1 // pred_fallthru
      _
    // Predicated region
    $region62: #{tpu_custom_call.1} parent=1 // pred_check
      _
    $region63: #{tpu_custom_call.1} parent=1 // pred_check_branch
      %329 = sbr.rel (0) target = $region65
    $region64: #{tpu_custom_call.1} parent=1 // pred_region
      %s331 = ssub.s32 128, 128
      %332 = vsyncadd [#allocation16], %s331
      %s333 = sshll.u32 [#allocation15], 4
      %s334 = int_to_ptr.vmem [resolvable:$true] %s333
      %339 = dma.vmem_to_hbm [thread:$0]  %s334, 128, %s8, [#allocation16], 64, 64, 4
    $region65: #{tpu_custom_call.1} parent=1 // pred_fallthru
      _
    // Predicated region
    $region66: #{tpu_custom_call.1} parent=1 // pred_check
      _
    $region67: #{tpu_custom_call.1} parent=1 // pred_check_branch
      %341 = sbr.rel (0) target = $region69
    $region68: #{tpu_custom_call.1} parent=1 // pred_region
      %342 = dma.done [#allocation4], 64
    $region69: #{tpu_custom_call.1} parent=1 // pred_fallthru
      _
    // Predicated region
    $region70: #{tpu_custom_call.1} parent=1 // pred_check
      _
    $region71: #{tpu_custom_call.1} parent=1 // pred_check_branch
      %344 = sbr.rel (0) target = $region73
    $region72: #{tpu_custom_call.1} parent=1 // pred_region
      %345 = dma.done [#allocation16], 128
    $region73: #{tpu_custom_call.1} parent=1 // pred_fallthru
      _
    %346 = vsyncpa [#allocation3], 1
    %347 = vsyncpa [#allocation6], 1
    %348 = vsyncpa [#allocation9], 1
    %349 = vsyncpa [#allocation12], 1
    %350 = vsyncpa [#allocation4], 1
    %351 = vsyncpa [#allocation16], 1

</llo_original>
